<compile_context>
chip_gen: v7x
topology: tpu7x:2x2x1
jax: 0.10.0
libtpu: 0.0.40
codegen_flags: <defaults>
</compile_context>

<pallas_src>
import functools

import jax
import jax.numpy as jnp
from jax.experimental import pallas as pl
from jax.experimental.pallas import tpu as pltpu


def _round_up(a, b):
    return ((a + b - 1) // b) * b


def _highway_kernel(x_ref, wc_ref, bc_ref, o_ref):
    D = o_ref.shape[-1]
    x = x_ref[...]

    # Single fused matmul: (tm, D) @ (D, 2D) -> (tm, 2D).  Feed the MXU in the
    # weight dtype (bf16) for full MXU rate; accumulate in f32.
    h = jnp.dot(
        x.astype(wc_ref.dtype), wc_ref[...], preferred_element_type=jnp.float32
    ) + bc_ref[...]

    t = jax.nn.sigmoid(h[:, :D])     # transfer gate (exp runs on the EUP slot)
    g = jnp.maximum(h[:, D:], 0.0)   # relu(fc2(x))

    xf = x.astype(jnp.float32)       # f32 only for the elementwise mix
    # y = t*g + (1-t)*x  rewritten as  x + t*(g - x): one fewer vector multiply.
    o_ref[...] = (xf + t * (g - xf)).astype(o_ref.dtype)


def prepare_highway_params(w1, b1, w2, b2, *, param_dtype=jnp.bfloat16):
    """PyTorch nn.Linear layout (out, in) -> fused RHS [W1^T | W2^T], fused bias.

    Call this ONCE outside the per-step jit path.  param_dtype=bf16 (default)
    keeps the resident weights small and the MXU at full rate; the bias stays
    f32 because it is added to the f32 accumulator.
    """
    D = w1.shape[0]
    wc = jnp.concatenate(
        [jnp.asarray(w1, param_dtype).T, jnp.asarray(w2, param_dtype).T], axis=1
    )                                                  # (D, 2D)
    bc = jnp.concatenate(
        [jnp.asarray(b1, jnp.float32), jnp.asarray(b2, jnp.float32)]
    ).reshape(1, 2 * D)                                # (1, 2D)
    return wc, bc


@functools.partial(jax.jit, static_argnames=("tm",))
def highway(x, wc, bc, *, tm=512):
    """x: [N, D];  wc: [D, 2D] fused [W1^T | W2^T];  bc: [1, 2D] (f32)."""
    N, D = x.shape
    assert wc.shape == (D, 2 * D) and bc.shape == (1, 2 * D)

    x_b = x.dtype.itemsize
    w_b = wc.dtype.itemsize
    b_b = bc.dtype.itemsize

    # Sublane packing of the x/y tiles: f32 -> 8, bf16 -> 16, int8 -> 32.
    sub = max(8, 32 // x_b)

    # Large tiles amortize the ~0.35us/step pipeline overhead, but cap so the
    # grid keeps >= 8 steps: each of v7x's two TensorCores then pipelines
    # across >= 2 steps and DMA stays hidden behind compute.
    tm_cap = _round_up(max(pl.cdiv(N, 8), sub), sub)
    tm_eff = max(sub, min(_round_up(tm, sub), tm_cap))

    grid = pl.cdiv(N, tm_eff)        # ragged last block handled by Pallas

    # Scoped-VMEM budget: double-buffered x / y tiles, double-buffered resident
    # weights + bias, plus the (tm, 2D) f32 matmul result and f32 temporaries.
    vmem_est = (
        2 * tm_eff * D * x_b                      # x tiles (in)
        + 2 * tm_eff * D * x_b                    # y tiles (out)
        + 2 * (D * 2 * D * w_b + 2 * D * b_b)     # fused weights + bias
        + 4 * tm_eff * 2 * D * 4                  # h / t / g / mix temporaries
    )
    vmem_limit = None
    if vmem_est > 24 * 1024 * 1024:
        # Raise the default scoped limit (16-32 MiB) for large D / large tiles;
        # cap below v7x's 64 MiB physical VMEM.  For D >~ 2048 a K-tiled
        # accumulator layout would replace the resident (D, 2D) RHS entirely.
        vmem_limit = min(_round_up(vmem_est + (4 << 20), 1 << 20), 56 << 20)

    rows_work = grid * tm_eff        # padded rows of the last block are computed too
    cost = pl.CostEstimate(
        flops=4 * rows_work * D * D,              # (rows, D) @ (D, 2D)
        transcendentals=rows_work * D,            # sigmoid
        bytes_accessed=2 * N * D * x_b            # x in + y out
        + wc.size * w_b + bc.size * b_b,          # resident weights, read once
    )

    return pl.pallas_call(
        _highway_kernel,
        out_shape=jax.ShapeDtypeStruct((N, D), x.dtype),
        grid_spec=pltpu.PrefetchScalarGridSpec(
            num_scalar_prefetch=0,
            grid=(grid,),
            in_specs=[
                pl.BlockSpec((tm_eff, D), lambda i: (i, 0)),   # x tile
                pl.BlockSpec((D, 2 * D), lambda i: (0, 0)),    # fused weights (resident)
                pl.BlockSpec((1, 2 * D), lambda i: (0, 0)),    # fused bias (resident)
            ],
            out_specs=pl.BlockSpec((tm_eff, D), lambda i: (i, 0)),
        ),
        compiler_params=pltpu.CompilerParams(
            dimension_semantics=("parallel",),
            vmem_limit_bytes=vmem_limit,
        ),
        cost_estimate=cost,
    )(x, wc, bc)


def _reference(x, w1, b1, w2, b2):
    h1 = x @ w1.T + b1
    h2 = x @ w2.T + b2
    t = jax.nn.sigmoid(h1)
    return t * jnp.maximum(h2, 0.0) + (1.0 - t) * x


if __name__ == "__main__":
    key = jax.random.PRNGKey(0)
    k_x, k_w1, k_b1, k_w2, k_b2 = jax.random.split(key, 5)

    # Flattened (batch*seq) rows x input_size.  N deliberately NOT a tile
    # multiple so the ragged-last-block path (no pad / no slice) is exercised.
    N, D = 200, 128

    x = jax.random.normal(k_x, (N, D), dtype=jnp.float32)

    # Deterministic init matching nn.Linear default: U(-1/sqrt(in), 1/sqrt(in)).
    bound = 1.0 / (D ** 0.5)
    w1 = jax.random.uniform(k_w1, (D, D), minval=-bound, maxval=bound, dtype=jnp.float32)
    b1 = jax.random.uniform(k_b1, (D,), minval=-bound, maxval=bound, dtype=jnp.float32)
    w2 = jax.random.uniform(k_w2, (D, D), minval=-bound, maxval=bound, dtype=jnp.float32)
    b2 = jax.random.uniform(k_b2, (D,), minval=-bound, maxval=bound, dtype=jnp.float32)

    # Weight fusion/transpose/bf16-cast happens once, outside the jit path.
    wc, bc = prepare_highway_params(w1, b1, w2, b2)

    y = highway(x, wc, bc)
    jax.block_until_ready(y)

    y_ref = _reference(x, w1, b1, w2, b2)
    # bf16 matmul inputs at D=128 give ~1e-3 absolute error vs the f32 reference.
    assert jnp.allclose(y, y_ref, atol=2e-2, rtol=2e-2), "mismatch vs reference"

    print("KERNEL_OK")
</pallas_src>

<mosaic_0001>
module attributes {stable_mosaic.version = 11 : i64} {
  func.func @_highway_kernel(%arg0: i32, %arg1: memref<32x128xf32, #tpu.memory_space<vmem>>, %arg2: memref<128x256xbf16, #tpu.memory_space<vmem>>, %arg3: memref<1x256xf32, #tpu.memory_space<vmem>>, %arg4: memref<32x128xf32, #tpu.memory_space<vmem>>) attributes {dimension_semantics = [#tpu.dimension_semantics<parallel>], iteration_bounds = array<i64: 7>, scalar_prefetch = 0 : i64, scratch_operands = 0 : i64, tpu.core_type = #tpu.core_type<tc>, window_params = [{transform_indices = @transform_0, window_bounds = array<i64: 32, 128>}, {pipeline_mode = #tpu.pipeline_mode<synchronous>, transform_indices = @transform_1, window_bounds = array<i64: 128, 256>}, {pipeline_mode = #tpu.pipeline_mode<synchronous>, transform_indices = @transform_2, window_bounds = array<i64: 1, 256>}, {transform_indices = @transform_3, window_bounds = array<i64: 32, 128>}]} {
    %c0 = arith.constant 0 : index
    %c0_0 = arith.constant 0 : index
    %0 = vector.load %arg1[%c0, %c0_0] : memref<32x128xf32, #tpu.memory_space<vmem>>, vector<32x128xf32>
    %1 = arith.truncf %0 : vector<32x128xf32> to vector<32x128xbf16>
    %c0_1 = arith.constant 0 : index
    %c0_2 = arith.constant 0 : index
    %2 = vector.load %arg2[%c0_1, %c0_2] : memref<128x256xbf16, #tpu.memory_space<vmem>>, vector<128x256xbf16>
    %cst = arith.constant dense<0.000000e+00> : vector<32x256xf32>
    %3 = tpu.matmul %1, %2, %cst {dimension_numbers = #tpu.dot_dimension_numbers<[1], [0], [0], [1], [0, 0, 1, 1], [], []>} : vector<32x128xbf16>, vector<128x256xbf16>, vector<32x256xf32> -> vector<32x256xf32>
    %c0_3 = arith.constant 0 : index
    %c0_4 = arith.constant 0 : index
    %4 = vector.load %arg3[%c0_3, %c0_4] : memref<1x256xf32, #tpu.memory_space<vmem>>, vector<1x256xf32>
    %5 = vector.broadcast %4 : vector<1x256xf32> to vector<32x256xf32>
    %6 = arith.addf %3, %5 : vector<32x256xf32>
    %7 = vector.extract_strided_slice %6 {offsets = [0, 0], sizes = [32, 128], strides = [1, 1]} : vector<32x256xf32> to vector<32x128xf32>
    %8 = arith.negf %7 : vector<32x128xf32>
    %9 = math.exp %8 : vector<32x128xf32>
    %cst_5 = arith.constant 1.000000e+00 : f32
    %10 = vector.broadcast %cst_5 : f32 to vector<32x128xf32>
    %11 = arith.addf %10, %9 : vector<32x128xf32>
    %12 = arith.divf %10, %11 : vector<32x128xf32>
    %13 = vector.extract_strided_slice %6 {offsets = [0, 128], sizes = [32, 128], strides = [1, 1]} : vector<32x256xf32> to vector<32x128xf32>
    %cst_6 = arith.constant 0.000000e+00 : f32
    %14 = vector.broadcast %cst_6 : f32 to vector<32x128xf32>
    %15 = arith.maximumf %13, %14 : vector<32x128xf32>
    %16 = arith.subf %15, %0 : vector<32x128xf32>
    %17 = arith.mulf %12, %16 : vector<32x128xf32>
    %18 = arith.addf %0, %17 : vector<32x128xf32>
    %c0_7 = arith.constant 0 : index
    %c0_8 = arith.constant 0 : index
    %19 = vector.load %arg4[%c0_7, %c0_8] : memref<32x128xf32, #tpu.memory_space<vmem>>, vector<32x128xf32>
    tpu.vector_store %arg4[%c0_7, %c0_8], %18 {strides = array<i32>} : memref<32x128xf32, #tpu.memory_space<vmem>>, vector<32x128xf32>,
    return
  }
  func.func @transform_0(%arg0: i32) -> (i32, i32) {
    %c0_i32 = arith.constant 0 : i32
    %c0_i32_0 = arith.constant 0 : i32
    return %arg0, %c0_i32 : i32, i32
  }
  func.func @transform_1(%arg0: i32) -> (i32, i32) {
    %c0_i32 = arith.constant 0 : i32
    %c0_i32_0 = arith.constant 0 : i32
    %c0_i32_1 = arith.constant 0 : i32
    return %c0_i32, %c0_i32_0 : i32, i32
  }
  func.func @transform_2(%arg0: i32) -> (i32, i32) {
    %c0_i32 = arith.constant 0 : i32
    %c0_i32_0 = arith.constant 0 : i32
    %c0_i32_1 = arith.constant 0 : i32
    return %c0_i32, %c0_i32_0 : i32, i32
  }
  func.func @transform_3(%arg0: i32) -> (i32, i32) {
    %c0_i32 = arith.constant 0 : i32
    %c0_i32_0 = arith.constant 0 : i32
    return %arg0, %c0_i32 : i32, i32
  }
}

</mosaic_0001>

<llo_original>
// kernel: highway.1
$region0: #{highway.1}
  #allocation0 [shape = 'u32[]', space=smem, size = 0x4, offset = 0x4, fixed_abs, tag = 'smem constant byte address 0x4 - core index']
  #allocation1 [shape = 'u32[144,128]{1,0:T(1,128)}', space=vmem, size = 0x12000, scoped, tag = 'internal scratch']
  %s0 = inlined_call_operand.hbm [shape: f32[200,128], index: 0, kind: input, shape index: {}]
  %s1 = inlined_call_operand.hbm [shape: bf16[128,256], index: 1, kind: input, shape index: {}]
  %s2 = inlined_call_operand.vmem [shape: f32[1,256], index: 2, kind: input, shape index: {}]
  %s3 = inlined_call_operand.hbm [shape: f32[200,128], index: 3, kind: output, shape index: {}]
  %s4 = sld [smem:[#allocation0]]
  $region53: #{highway.1} parent=0
    _
  %s6 = ssub.s32 1, %s4
  %s7 = scalar_select 0, %s6, %s4
  $region1: #{highway.1} parent=0
    #allocation2 [shape = 'u8[32768]{0}', space=vmem, size = 0x8000, scoped, tag = 'input window, operand 0']
    #allocation3 [shape = 's32[2]{0}', space=sflag, size = 0x8, scoped, tag = 'scoped memory for highway.1']
    #allocation4 [shape = 's32[2]{0}', space=sflag, size = 0x8, scoped, tag = 'scoped memory for highway.1']
    #allocation5 [shape = 'u8[65536]{0}', space=vmem, size = 0x10000, scoped, tag = 'input window, operand 1, single buffered']
    #allocation6 [shape = 's32[1]{0}', space=sflag, size = 0x4, scoped, tag = 'scoped memory for highway.1']
    #allocation7 [shape = 'u8[32768]{0}', space=vmem, size = 0x8000, scoped, tag = 'output window, operand 0']
    %8 = vsyncpa [#allocation3], 0
    %s9 = scalar_lea.sflag [#allocation3], 1
    %10 = vsyncpa %s9, 0
    %11 = vsyncpa [#allocation6], 0
    %12 = vsyncpa [#allocation4], 0
    %s13 = scalar_lea.sflag [#allocation4], 1
    %14 = vsyncpa %s13, 0
    loop: start=0, step=1, limit=9
    $region2: #{highway.1} parent=1 // loop_pre_header
      _
    $region3: #{highway.1} parent=1 // loop_header
      %s16 = sphi 0, %s20
      %p17 = scmp.ge.s32.totalorder %s16, 9
      %s26 = sphi 0, %s28
      %s29 = sphi 0, %s26
      %s30 = sphi 0, %s29
      %s46 = sphi 0, %s30
      %s50 = sphi 0, %s50
      %s52 = sphi 0, %s50
      %s53 = sphi 0, %s52
      %s67 = sphi 0, %s53
      %s71 = sphi 0, %s71
      %s73 = sphi 0, %s71
      %s74 = sphi 0, %s73
      %s88 = sphi 0, %s74
      %s94 = sphi 0, %s96
      %s97 = sphi 0, %s94
      %s98 = sphi 0, %s97
      %s114 = sphi 0, %s98
    $region4: #{highway.1} parent=1 // loop_header_branch
      %19 = sbr.rel (%p17) target = $region8
    $region5: #{highway.1} parent=1 // loop_body
      %s21 = ssub.s32 %s16, 1
      %s22 = ssub.s32 %s16, 2
      %s23 = sadd.s32 %s16, 1
      %s24 = ssub.s32 %s16, %s23
      %p25 = scmp.eq.s32.totalorder %s24, 0
      %s27 = sadd.s32 %s26, 1
      %s28 = scalar_select %p25, %s26, %s27
      %p31 = pneg %p25
      %p32 = scmp.eq.s32.totalorder %s16, 6
      %p33 = por %p31, %p32
      %p34 = scmp.ne.s32.totalorder %s26, %s29
      %p35 = scmp.eq.s32.totalorder %s16, 0
      %p36 = por %p34, %p35
      %p37 = scmp.ne.s32.totalorder %s26, %s29
      %p38 = scmp.eq.s32.totalorder %s21, 6
      %p39 = por %p37, %p38
      %p40 = scmp.ne.s32.totalorder %s29, %s30
      %p41 = scmp.eq.s32.totalorder %s21, 0
      %p42 = por %p40, %p41
      %p43 = scmp.ne.s32.totalorder %s29, %s30
      %p44 = scmp.eq.s32.totalorder %s22, 6
      %p45 = por %p43, %p44
      %p47 = scmp.ne.s32.totalorder %s30, %s46
      %p48 = scmp.eq.s32.totalorder %s22, 0
      %p49 = por %p47, %p48
      %s51 = sadd.s32 %s50, 1
      %p54 = scmp.eq.s32.totalorder %s16, 6
      %p55 = scmp.ne.s32.totalorder %s50, %s52
      %p56 = scmp.eq.s32.totalorder %s16, 0
      %p57 = por %p55, %p56
      %p58 = scmp.ne.s32.totalorder %s50, %s52
      %p59 = scmp.eq.s32.totalorder %s21, 6
      %p60 = por %p58, %p59
      %p61 = scmp.ne.s32.totalorder %s52, %s53
      %p62 = scmp.eq.s32.totalorder %s21, 0
      %p63 = por %p61, %p62
      %p64 = scmp.ne.s32.totalorder %s52, %s53
      %p65 = scmp.eq.s32.totalorder %s22, 6
      %p66 = por %p64, %p65
      %p68 = scmp.ne.s32.totalorder %s53, %s67
      %p69 = scmp.eq.s32.totalorder %s22, 0
      %p70 = por %p68, %p69
      %s72 = sadd.s32 %s71, 1
      %p75 = scmp.eq.s32.totalorder %s16, 6
      %p76 = scmp.ne.s32.totalorder %s71, %s73
      %p77 = scmp.eq.s32.totalorder %s16, 0
      %p78 = por %p76, %p77
      %p79 = scmp.ne.s32.totalorder %s71, %s73
      %p80 = scmp.eq.s32.totalorder %s21, 6
      %p81 = por %p79, %p80
      %p82 = scmp.ne.s32.totalorder %s73, %s74
      %p83 = scmp.eq.s32.totalorder %s21, 0
      %p84 = por %p82, %p83
      %p85 = scmp.ne.s32.totalorder %s73, %s74
      %p86 = scmp.eq.s32.totalorder %s22, 6
      %p87 = por %p85, %p86
      %p89 = scmp.ne.s32.totalorder %s74, %s88
      %p90 = scmp.eq.s32.totalorder %s22, 0
      %p91 = por %p89, %p90
      %s92 = ssub.s32 %s16, %s23
      %p93 = scmp.eq.s32.totalorder %s92, 0
      %s95 = sadd.s32 %s94, 1
      %s96 = scalar_select %p93, %s94, %s95
      %p99 = pneg %p93
      %p100 = scmp.eq.s32.totalorder %s16, 6
      %p101 = por %p99, %p100
      %p102 = scmp.ne.s32.totalorder %s94, %s97
      %p103 = scmp.eq.s32.totalorder %s16, 0
      %p104 = por %p102, %p103
      %p105 = scmp.ne.s32.totalorder %s94, %s97
      %p106 = scmp.eq.s32.totalorder %s21, 6
      %p107 = por %p105, %p106
      %p108 = scmp.ne.s32.totalorder %s97, %s98
      %p109 = scmp.eq.s32.totalorder %s21, 0
      %p110 = por %p108, %p109
      %p111 = scmp.ne.s32.totalorder %s97, %s98
      %p112 = scmp.eq.s32.totalorder %s22, 6
      %p113 = por %p111, %p112
      %p115 = scmp.ne.s32.totalorder %s98, %s114
      %p116 = scmp.eq.s32.totalorder %s22, 0
      %p117 = por %p115, %p116
      %p118 = scmp.le.s32.totalorder 1, %s16
      %p119 = scmp.lt.s32.totalorder %s16, 8
      %p120 = pnand %p118, %p119
      %p121 = pneg %p120
      // Predicated region
      $region9: #{highway.1} parent=5 // pred_check
        _
      $region10: #{highway.1} parent=5 // pred_check_branch
        %123 = sbr.rel (%p120) target = $region12
      $region11: #{highway.1} parent=5 // pred_region
        %s124 = ssub.s32 %s16, 1
        // Predicated region
        $region13: #{highway.1} parent=11 // pred_check
          %p125 = pneg %p63
        $region14: #{highway.1} parent=11 // pred_check_branch
          %127 = sbr.rel (%p125) target = $region16
        $region15: #{highway.1} parent=11 // pred_region
          %s129 = ssub.s32 2048, 2048
          %130 = vsyncadd [#allocation6], %s129
          %s131 = sshll.u32 [#allocation5], 4
          %s132 = int_to_ptr.vmem [resolvable:$true] %s131
          %137 = dma.hbm_to_vmem [thread:$0]  %s1, 2048, %s132, [#allocation6], 128, 128, 8
        $region16: #{highway.1} parent=11 // pred_fallthru
          _
        // Predicated region
        $region17: #{highway.1} parent=11 // pred_check
          %p138 = pneg %p84
        $region18: #{highway.1} parent=11 // pred_check_branch
          %140 = sbr.rel (%p138) target = $region20
        $region19: #{highway.1} parent=11 // pred_region
          _
        $region20: #{highway.1} parent=11 // pred_fallthru
          _
      $region12: #{highway.1} parent=5 // pred_fallthru
        _
      %p141 = scmp.lt.s32.totalorder %s16, 7
      // Predicated region
      $region21: #{highway.1} parent=5 // pred_check
        %p142 = pneg %p141
      $region22: #{highway.1} parent=5 // pred_check_branch
        %144 = sbr.rel (%p142) target = $region24
      $region23: #{highway.1} parent=5 // pred_region
        // Predicated region
        $region25: #{highway.1} parent=23 // pred_check
          %p145 = pneg %p36
        $region26: #{highway.1} parent=23 // pred_check_branch
          %147 = sbr.rel (%p145) target = $region28
        $region27: #{highway.1} parent=23 // pred_region
          %s148 = sand.u32 %s26, 1
          %s149 = scalar_lea.sflag [#allocation3], %s148
          %s150 = sand.u32 %s26, 1
          %s151 = smul.addr %s150, 32
          %s152 = scalar_lea.vmem [#allocation2], %s151
          %s153 = smul.u32 4, %s16
          %s154 = ssub.s32 25, %s153
          %p155 = scmp.lt.s32.totalorder %s154, 4
          %s156 = scalar_select %p155, %s154, 4
          %s157 = smul.u32 128, %s156
          %s159 = ssub.s32 512, %s157
          %160 = vsyncadd %s149, %s159
          %p161 = scmp.ne.s32.totalorder 0, %s157
          %s162 = smul.addr %s153, 128
          %s163 = scalar_lea.hbm %s0, %s162
          %s164 = smul.u32 8, %s156
          %s165 = sshll.u32 %s152, 4
          %s166 = int_to_ptr.vmem [resolvable:$true] %s165
          %s167 = sshll.u32 %s164, 4
          %171 = dma.hbm_to_vmem [thread:$0]  (%p161), %s163, %s167, %s166, %s149, 128, 128, 8
        $region28: #{highway.1} parent=23 // pred_fallthru
          _
      $region24: #{highway.1} parent=5 // pred_fallthru
        _
      %p172 = scmp.le.s32.totalorder 1, %s16
      %p173 = scmp.lt.s32.totalorder %s16, 8
      %p174 = pnand %p172, %p173
      %p175 = pneg %p174
      // Predicated region
      $region29: #{highway.1} parent=5 // pred_check
        _
      $region30: #{highway.1} parent=5 // pred_check_branch
        %177 = sbr.rel (%p174) target = $region32
      $region31: #{highway.1} parent=5 // pred_region
        %s178 = ssub.s32 %s16, 1
        %s179 = sand.u32 %s29, 1
        %s180 = scalar_lea.sflag [#allocation3], %s179
        %s181 = sand.u32 %s29, 1
        %s182 = smul.addr %s181, 32
        %s183 = scalar_lea.vmem [#allocation2], %s182
        // Predicated region
        $region33: #{highway.1} parent=31 // pred_check
          %p184 = pneg %p42
        $region34: #{highway.1} parent=31 // pred_check_branch
          %186 = sbr.rel (%p184) target = $region36
        $region35: #{highway.1} parent=31 // pred_region
          %187 = dma.done %s180, 512
        $region36: #{highway.1} parent=31 // pred_fallthru
          _
        // Predicated region
        $region37: #{highway.1} parent=31 // pred_check
          %p188 = pneg %p63
        $region38: #{highway.1} parent=31 // pred_check_branch
          %190 = sbr.rel (%p188) target = $region40
        $region39: #{highway.1} parent=31 // pred_region
          %191 = dma.done [#allocation6], 2048
        $region40: #{highway.1} parent=31 // pred_fallthru
          _
        %s192 = sand.u32 %s29, 1
        %s193 = scalar_lea.sflag [#allocation3], %s192
        %s194 = sand.u32 %s29, 1
        %s195 = smul.addr %s194, 32
        %s196 = scalar_lea.vmem [#allocation2], %s195
        %p197 = pneg %p42
        %p198 = pneg %p39
        %p199 = pneg %p63
        %p200 = pneg %p60
        %p201 = pneg %p84
        %p202 = pneg %p81
        %p203 = pneg %p110
        %p204 = pneg %p107
        %s205 = sand.u32 %s97, 1
        %s206 = scalar_lea.sflag [#allocation4], %s205
        %s207 = sand.u32 %s97, 1
        %s208 = smul.addr %s207, 32
        %s209 = scalar_lea.vmem [#allocation7], %s208
        %s210 = smul.u32 4, %s21
        %s211 = ssub.s32 25, %s210
        %p212 = scmp.lt.s32.totalorder %s211, 4
        %s213 = scalar_select %p212, %s211, 4
        %s214 = smul.u32 128, %s213
        %s215 = smul.u32 4, %s21
        %s216 = ssub.s32 25, %s215
        %p217 = scmp.lt.s32.totalorder %s216, 4
        %s218 = scalar_select %p217, %s216, 4
        %s219 = smul.u32 128, %s218
        %v221 = vld [vmem:[%s183] sm:$0xff]
        %v222 = vld [vmem:[%s183 + $0x8] sm:$0xff]
        %v223 = vld [vmem:[%s183 + $0x10] sm:$0xff]
        %v224 = vld [vmem:[%s183 + $0x18] sm:$0xff]
        %v225 = vpack.c.bf16 %v222, %v221
        %v226 = vpack.c.bf16 %v224, %v223
        %v227 = vld [vmem:[#allocation5] sm:$0xff]
        %v228 = vld [vmem:[#allocation5 + $0x8] sm:$0xff]
        %v229 = vld [vmem:[#allocation5 + $0x10] sm:$0xff]
        %v230 = vld [vmem:[#allocation5 + $0x18] sm:$0xff]
        %v231 = vld [vmem:[#allocation5 + $0x20] sm:$0xff]
        %v232 = vld [vmem:[#allocation5 + $0x28] sm:$0xff]
        %v233 = vld [vmem:[#allocation5 + $0x30] sm:$0xff]
        %v234 = vld [vmem:[#allocation5 + $0x38] sm:$0xff]
        %v235 = vld [vmem:[#allocation5 + $0x40] sm:$0xff]
        %v236 = vld [vmem:[#allocation5 + $0x48] sm:$0xff]
        %v237 = vld [vmem:[#allocation5 + $0x50] sm:$0xff]
        %v238 = vld [vmem:[#allocation5 + $0x58] sm:$0xff]
        %v239 = vld [vmem:[#allocation5 + $0x60] sm:$0xff]
        %v240 = vld [vmem:[#allocation5 + $0x68] sm:$0xff]
        %v241 = vld [vmem:[#allocation5 + $0x70] sm:$0xff]
        %v242 = vld [vmem:[#allocation5 + $0x78] sm:$0xff]
        %v243 = vld [vmem:[%s2] sm:$0x3]
        %v245 = vlaneseq
        %v246 = vshrl.u32 %v245, 7
        %v247 = vsub.s32 0, %v246
        %v248 = vrot.slane %v243, %v247
        %v249 = vlaneseq
        %v250 = vshrl.u32 %v249, 7
        %v251 = vsub.s32 1, %v250
        %v252 = vrot.slane %v243, %v251
        %v271 = vunpack.c.l.b16 %v227
        %v272 = vunpack.c.h.b16 %v227
        %v273 = vunpack.c.l.b16 %v228
        %v274 = vunpack.c.h.b16 %v228
        %v275 = vunpack.c.l.b16 %v229
        %v276 = vunpack.c.h.b16 %v229
        %v277 = vunpack.c.l.b16 %v230
        %v278 = vunpack.c.h.b16 %v230
        %v279 = vunpack.c.l.b16 %v231
        %v280 = vunpack.c.h.b16 %v231
        %v281 = vunpack.c.l.b16 %v232
        %v282 = vunpack.c.h.b16 %v232
        %v283 = vunpack.c.l.b16 %v233
        %v284 = vunpack.c.h.b16 %v233
        %v285 = vunpack.c.l.b16 %v234
        %v286 = vunpack.c.h.b16 %v234
        %v287 = vunpack.c.l.b16 %v235
        %v288 = vunpack.c.h.b16 %v235
        %v289 = vunpack.c.l.b16 %v236
        %v290 = vunpack.c.h.b16 %v236
        %v291 = vunpack.c.l.b16 %v237
        %v292 = vunpack.c.h.b16 %v237
        %v293 = vunpack.c.l.b16 %v238
        %v294 = vunpack.c.h.b16 %v238
        %v295 = vunpack.c.l.b16 %v239
        %v296 = vunpack.c.h.b16 %v239
        %v297 = vunpack.c.l.b16 %v240
        %v298 = vunpack.c.h.b16 %v240
        %v299 = vunpack.c.l.b16 %v241
        %v300 = vunpack.c.h.b16 %v241
        %v301 = vunpack.c.l.b16 %v242
        %v302 = vunpack.c.h.b16 %v242
        %v303 = vpack.c.b16 %v273, %v271
        %v304 = vpack.c.b16 %v274, %v272
        %v305 = vpack.c.b16 %v277, %v275
        %v306 = vpack.c.b16 %v278, %v276
        %v307 = vpack.c.b16 %v281, %v279
        %v308 = vpack.c.b16 %v282, %v280
        %v309 = vpack.c.b16 %v285, %v283
        %v310 = vpack.c.b16 %v286, %v284
        %v311 = vpack.c.b16 %v289, %v287
        %v312 = vpack.c.b16 %v290, %v288
        %v313 = vpack.c.b16 %v293, %v291
        %v314 = vpack.c.b16 %v294, %v292
        %v315 = vpack.c.b16 %v297, %v295
        %v316 = vpack.c.b16 %v298, %v296
        %v317 = vpack.c.b16 %v301, %v299
        %v318 = vpack.c.b16 %v302, %v300
        %335 = vmatprep.subr.bf16.mxu0 %v304
        %336 = vmatpush1.bf16.msra.mxu0 %v303
        %337 = vmatprep.subr.bf16.mxu0 %v306
        %338 = vmatpush1.bf16.msra.mxu0 %v305
        %339 = vmatprep.subr.bf16.mxu0 %v308
        %340 = vmatpush1.bf16.msra.mxu0 %v307
        %341 = vmatprep.subr.bf16.mxu0 %v310
        %342 = vmatpush1.bf16.msra.mxu0 %v309
        %343 = vmatprep.subr.bf16.mxu0 %v312
        %344 = vmatpush1.bf16.msra.mxu0 %v311
        %345 = vmatprep.subr.bf16.mxu0 %v314
        %346 = vmatpush1.bf16.msra.mxu0 %v313
        %347 = vmatprep.subr.bf16.mxu0 %v316
        %348 = vmatpush1.bf16.msra.mxu0 %v315
        %349 = vmatprep.subr.bf16.mxu0 %v318
        %350 = vmatpush1.bf16.msra.mxu0 %v317
        %351 = vmatprep.subr.bf16.mxu0 0
        %352 = vmatpush1.bf16.msra.mxu0 0
        %353 = vmatprep.subr.bf16.mxu0 0
        %354 = vmatpush1.bf16.msra.mxu0 0
        %355 = vmatprep.subr.bf16.mxu0 0
        %356 = vmatpush1.bf16.msra.mxu0 0
        %357 = vmatprep.subr.bf16.mxu0 0
        %358 = vmatpush1.bf16.msra.mxu0 0
        %359 = vmatprep.subr.bf16.mxu0 0
        %360 = vmatpush1.bf16.msra.mxu0 0
        %361 = vmatprep.subr.bf16.mxu0 0
        %362 = vmatpush1.bf16.msra.mxu0 0
        %363 = vmatprep.subr.bf16.mxu0 0
        %364 = vmatpush1.bf16.msra.mxu0 0
        %365 = vmatprep.subr.bf16.mxu0 0
        %366 = vmatpush1.bf16.msra.mxu0 0
        %367 = vmatprep.mubr.bf16.mxu0 0
        %368 = vmatmul.mubr.bf16.gmra.mrb[0].mxu0 %v225
        %v369 = vpop.f32.mrb[0].mxu0
        %v370 = vadd.f32 %v248, %v369
        %v371 = vpop.f32.mrb[0].mxu0
        %v372 = vadd.f32 %v252, %v371
        %v373 = vpop.f32.mrb[0].mxu0
        %v374 = vadd.f32 %v248, %v373
        %v375 = vpop.f32.mrb[0].mxu0
        %v376 = vadd.f32 %v252, %v375
        %377 = vmatprep.mubr.bf16.mxu0 0
        %378 = vmatmul.mubr.bf16.gmra.mrb[0].mxu0 %v226
        %v379 = vpop.f32.mrb[0].mxu0
        %v380 = vadd.f32 %v248, %v379
        %v381 = vpop.f32.mrb[0].mxu0
        %v382 = vadd.f32 %v252, %v381
        %v383 = vpop.f32.mrb[0].mxu0
        %v384 = vadd.f32 %v248, %v383
        %v385 = vpop.f32.mrb[0].mxu0
        %v386 = vadd.f32 %v252, %v385
        %387 = vdwg.mxu0
        %v388 = vxor.u32 %v370, 2147483648
        %v389 = vxor.u32 %v374, 2147483648
        %v390 = vxor.u32 %v380, 2147483648
        %v391 = vxor.u32 %v384, 2147483648
        %v392 = vmul.f32 %v388, 1.442695
        %v393 = vpow.pop %v392
        %v394 = vmul.f32 %v389, 1.442695
        %v395 = vpow.pop %v394
        %v396 = vmul.f32 %v390, 1.442695
        %v397 = vpow.pop %v396
        %v398 = vmul.f32 %v391, 1.442695
        %v399 = vpow.pop %v398
        %v400 = vadd.f32 %v393, 1.0
        %v401 = vadd.f32 %v395, 1.0
        %v402 = vadd.f32 %v397, 1.0
        %v403 = vadd.f32 %v399, 1.0
        %v404 = vrcp.pop %v400
        %v405 = vmul.f32 1.0, %v404
        %v406 = vrcp.pop %v401
        %v407 = vmul.f32 1.0, %v406
        %v408 = vrcp.pop %v402
        %v409 = vmul.f32 1.0, %v408
        %v410 = vrcp.pop %v403
        %v411 = vmul.f32 1.0, %v410
        %v412 = vmax.f32 %v372, 0.0
        %v413 = vmax.f32 %v376, 0.0
        %v414 = vmax.f32 %v382, 0.0
        %v415 = vmax.f32 %v386, 0.0
        %v416 = vsub.f32 %v412, %v221
        %v417 = vsub.f32 %v413, %v222
        %v418 = vsub.f32 %v414, %v223
        %v419 = vsub.f32 %v415, %v224
        %v420 = vmul.f32 %v405, %v416
        %v421 = vmul.f32 %v407, %v417
        %v422 = vmul.f32 %v409, %v418
        %v423 = vmul.f32 %v411, %v419
        %v424 = vadd.f32 %v221, %v420
        %v425 = vadd.f32 %v222, %v421
        %v426 = vadd.f32 %v223, %v422
        %v427 = vadd.f32 %v224, %v423
        %428 = vst [vmem:[%s209] sm:$0xff] %v424
        %429 = vst [vmem:[%s209 + $0x8] sm:$0xff] %v425
        %430 = vst [vmem:[%s209 + $0x10] sm:$0xff] %v426
        %431 = vst [vmem:[%s209 + $0x18] sm:$0xff] %v427
        %s432 = sand.u32 %s97, 1
        %s433 = scalar_lea.sflag [#allocation4], %s432
        %s434 = sand.u32 %s97, 1
        %s435 = smul.addr %s434, 32
        %s436 = scalar_lea.vmem [#allocation7], %s435
        // Predicated region
        $region41: #{highway.1} parent=31 // pred_check
          %p437 = pneg %p107
        $region42: #{highway.1} parent=31 // pred_check_branch
          %439 = sbr.rel (%p437) target = $region44
        $region43: #{highway.1} parent=31 // pred_region
          %s440 = smul.u32 4, %s21
          %s441 = ssub.s32 25, %s440
          %p442 = scmp.lt.s32.totalorder %s441, 4
          %s443 = scalar_select %p442, %s441, 4
          %s444 = smul.u32 128, %s443
          %s446 = ssub.s32 512, %s444
          %447 = vsyncadd %s433, %s446
          %p448 = scmp.ne.s32.totalorder 0, %s444
          %s449 = smul.addr %s440, 128
          %s450 = scalar_lea.hbm %s3, %s449
          %s451 = smul.u32 8, %s443
          %s452 = sshll.u32 %s436, 4
          %s453 = int_to_ptr.vmem [resolvable:$true] %s452
          %s454 = sshll.u32 %s451, 4
          %458 = dma.vmem_to_hbm [thread:$0]  (%p448), %s453, %s454, %s450, %s433, 128, 128, 8
        $region44: #{highway.1} parent=31 // pred_fallthru
          _
      $region32: #{highway.1} parent=5 // pred_fallthru
        _
      %p459 = scmp.le.s32.totalorder 2, %s16
      // Predicated region
      $region45: #{highway.1} parent=5 // pred_check
        %p460 = pneg %p459
      $region46: #{highway.1} parent=5 // pred_check_branch
        %462 = sbr.rel (%p460) target = $region48
      $region47: #{highway.1} parent=5 // pred_region
        %s463 = ssub.s32 %s16, 2
        // Predicated region
        $region49: #{highway.1} parent=47 // pred_check
          %p464 = pneg %p113
        $region50: #{highway.1} parent=47 // pred_check_branch
          %466 = sbr.rel (%p464) target = $region52
        $region51: #{highway.1} parent=47 // pred_region
          %s467 = sand.u32 %s98, 1
          %s468 = scalar_lea.sflag [#allocation4], %s467
          %s469 = sand.u32 %s98, 1
          %s470 = smul.addr %s469, 32
          %s471 = scalar_lea.vmem [#allocation7], %s470
          %472 = dma.done %s468, 512
        $region52: #{highway.1} parent=47 // pred_fallthru
          _
      $region48: #{highway.1} parent=5 // pred_fallthru
        _
    $region6: #{highway.1} parent=1 // loop_footer
      %s20 = sadd.s32 1, %s16
    $region7: #{highway.1} parent=1 // loop_footer_branch
      %15 = sbr.rel target = $region3
    $region8: #{highway.1} parent=1 // loop_exit
      _
    %473 = vsyncpa [#allocation3], 1
    %s474 = scalar_lea.sflag [#allocation3], 1
    %475 = vsyncpa %s474, 1
    %476 = vsyncpa [#allocation6], 1
    %477 = vsyncpa [#allocation4], 1
    %s478 = scalar_lea.sflag [#allocation4], 1
    %479 = vsyncpa %s478, 1

</llo_original>
